<compile_context>
chip_gen: v5e
topology: v5e:2x2
jax: 0.10.0
libtpu: 0.0.40
codegen_flags: <defaults>
</compile_context>

<pallas_src>
import functools

import jax
import jax.numpy as jnp
from jax.experimental import pallas as pl
from jax.experimental.pallas import tpu as pltpu


# -----------------------------------------------------------------------------
# Pallas kernels
# -----------------------------------------------------------------------------
def _mm_affine_kernel(relu, x_ref, w_ref, s_ref, b_ref, o_ref):
    """o = [relu]((x @ w) * s + b)  -- fused conv(as matmul) + folded-BN + ReLU."""
    acc = jnp.dot(x_ref[...], w_ref[...], preferred_element_type=jnp.float32)
    y = acc * s_ref[...] + b_ref[...]
    if relu:
        y = jnp.maximum(y, 0.0)
    o_ref[...] = y.astype(o_ref.dtype)


def _dual_mm_affine_kernel(n2, x2_ref, w2_ref, s2_ref, b2_ref,
                           x3_ref, w3_ref, s3_ref, b3_ref, o_ref):
    """Two fused conv+BN+ReLU matmuls on the same stride-2 output row tile,
    written side by side into one lane-dense output slab:
    o[:, :n2] = branch2, o[:, n2:] = branch3_3  (n2 = 384, 128-aligned)."""
    y2 = jnp.dot(x2_ref[...], w2_ref[...], preferred_element_type=jnp.float32)
    y2 = jnp.maximum(y2 * s2_ref[...] + b2_ref[...], 0.0)
    y3 = jnp.dot(x3_ref[...], w3_ref[...], preferred_element_type=jnp.float32)
    y3 = jnp.maximum(y3 * s3_ref[...] + b3_ref[...], 0.0)
    o_ref[:, :n2] = y2.astype(o_ref.dtype)
    o_ref[:, n2:] = y3.astype(o_ref.dtype)


# -----------------------------------------------------------------------------
# Tiling helpers (ragged M handled by zero-padding rows, sliced off afterwards)
# -----------------------------------------------------------------------------
def _round_up(x, m):
    return (x + m - 1) // m * m


def _pick_tm(m, cap=512):
    return min(cap, _round_up(m, 8))


def _pad_rows(x2d, tm):
    m = x2d.shape[0]
    mp = _round_up(m, tm)
    if mp != m:
        x2d = jnp.pad(x2d, ((0, mp - m), (0, 0)))
    return x2d


_COMPILER_PARAMS = pltpu.CompilerParams(
    dimension_semantics=("parallel",),
    vmem_limit_bytes=32 * 1024 * 1024,
)


# -----------------------------------------------------------------------------
# pallas_call wrappers
# -----------------------------------------------------------------------------
def matmul_affine(x2d, w, scale, shift, *, relu=True,
                  out_dtype=jnp.bfloat16, tm_cap=512):
    """Fused (M,K)@(K,N) matmul + per-channel affine (+ReLU) on the MXU
    (bf16 inputs, f32 accumulate, f32 affine)."""
    M, K = x2d.shape
    N = w.shape[1]
    tm = _pick_tm(M, tm_cap)
    xp = _pad_rows(x2d.astype(jnp.bfloat16), tm)
    Mp = xp.shape[0]

    out = pl.pallas_call(
        functools.partial(_mm_affine_kernel, relu),
        out_shape=jax.ShapeDtypeStruct((Mp, N), out_dtype),
        grid_spec=pltpu.PrefetchScalarGridSpec(
            num_scalar_prefetch=0,
            grid=(Mp // tm,),
            in_specs=[
                pl.BlockSpec((tm, K), lambda i: (i, 0)),
                pl.BlockSpec((K, N), lambda i: (0, 0)),
                pl.BlockSpec((1, N), lambda i: (0, 0)),
                pl.BlockSpec((1, N), lambda i: (0, 0)),
            ],
            out_specs=pl.BlockSpec((tm, N), lambda i: (i, 0)),
        ),
        compiler_params=_COMPILER_PARAMS,
        cost_estimate=pl.CostEstimate(
            flops=2 * Mp * K * N,
            transcendentals=0,
            bytes_accessed=2 * Mp * K + 2 * K * N + 2 * Mp * N),
    )(xp, w.astype(jnp.bfloat16),
      scale.reshape(1, N).astype(jnp.float32),
      shift.reshape(1, N).astype(jnp.float32))
    return out[:M]


def dual_matmul_affine(x2, w2, s2, b2, x3, w3, s3, b3, *,
                       out_dtype=jnp.float32, tm_cap=512):
    """Fused tail kernel: branch2 and branch3_3 conv+BN+ReLU on the same stride-2
    output grid, one launch, one lane-dense (M, N2+N3) output write."""
    M, K2 = x2.shape
    _, K3 = x3.shape
    N2, N3 = w2.shape[1], w3.shape[1]
    tm = _pick_tm(M, tm_cap)
    x2p = _pad_rows(x2.astype(jnp.bfloat16), tm)
    x3p = _pad_rows(x3.astype(jnp.bfloat16), tm)
    Mp = x2p.shape[0]

    out = pl.pallas_call(
        functools.partial(_dual_mm_affine_kernel, N2),
        out_shape=jax.ShapeDtypeStruct((Mp, N2 + N3), out_dtype),
        grid_spec=pltpu.PrefetchScalarGridSpec(
            num_scalar_prefetch=0,
            grid=(Mp // tm,),
            in_specs=[
                pl.BlockSpec((tm, K2), lambda i: (i, 0)),
                pl.BlockSpec((K2, N2), lambda i: (0, 0)),
                pl.BlockSpec((1, N2), lambda i: (0, 0)),
                pl.BlockSpec((1, N2), lambda i: (0, 0)),
                pl.BlockSpec((tm, K3), lambda i: (i, 0)),
                pl.BlockSpec((K3, N3), lambda i: (0, 0)),
                pl.BlockSpec((1, N3), lambda i: (0, 0)),
                pl.BlockSpec((1, N3), lambda i: (0, 0)),
            ],
            out_specs=pl.BlockSpec((tm, N2 + N3), lambda i: (i, 0)),
        ),
        compiler_params=_COMPILER_PARAMS,
        cost_estimate=pl.CostEstimate(
            flops=2 * Mp * (K2 * N2 + K3 * N3),
            transcendentals=0,
            bytes_accessed=(2 * Mp * (K2 + K3) + 2 * (K2 * N2 + K3 * N3)
                            + 4 * Mp * (N2 + N3))),
    )(x2p, w2.astype(jnp.bfloat16),
      s2.reshape(1, N2).astype(jnp.float32), b2.reshape(1, N2).astype(jnp.float32),
      x3p, w3.astype(jnp.bfloat16),
      s3.reshape(1, N3).astype(jnp.float32), b3.reshape(1, N3).astype(jnp.float32))
    return out[:M]


# -----------------------------------------------------------------------------
# Glue: im2col / maxpool (layout plumbing only; hot path stays in Pallas)
# -----------------------------------------------------------------------------
def im2col(x_nhwc, kh, kw, stride, pad):
    """(N,H,W,C) -> ((N*Ho*Wo), kh*kw*C) with tap-major [tap0 C, tap1 C, ...] order."""
    N, H, W, C = x_nhwc.shape
    if pad:
        x_nhwc = jnp.pad(x_nhwc, ((0, 0), (pad, pad), (pad, pad), (0, 0)))
    Hp, Wp = H + 2 * pad, W + 2 * pad
    Ho = (Hp - kh) // stride + 1
    Wo = (Wp - kw) // stride + 1
    cols = []
    for i in range(kh):
        for j in range(kw):
            cols.append(x_nhwc[:, i:i + stride * (Ho - 1) + 1:stride,
                               j:j + stride * (Wo - 1) + 1:stride, :])
    patches = jnp.concatenate(cols, axis=-1)
    return patches.reshape(N * Ho * Wo, kh * kw * C), Ho, Wo


def maxpool_3x3_s2(x_nhwc):
    N, H, W, C = x_nhwc.shape
    Ho = (H - 3) // 2 + 1
    Wo = (W - 3) // 2 + 1
    out = None
    for i in range(3):
        for j in range(3):
            s = x_nhwc[:, i:i + 2 * (Ho - 1) + 1:2, j:j + 2 * (Wo - 1) + 1:2, :]
            out = s if out is None else jnp.maximum(out, s)
    return out


# -----------------------------------------------------------------------------
# Parameters (deterministic, synthetic). Eval-mode BN + conv bias are folded
# into a per-output-channel (scale, shift) pair; weights stored as bf16 with
# rows in im2col tap-major order ((kh,kw) row-major, then input channel).
# -----------------------------------------------------------------------------
def _conv_bn_params(key, kh, kw, cin, cout, eps=1e-5):
    kw_, kb_, kg_, kbe_ = jax.random.split(key, 4)
    w = 0.05 * jax.random.normal(kw_, (kh * kw * cin, cout), jnp.float32)
    conv_b = 0.05 * jax.random.normal(kb_, (cout,), jnp.float32)
    gamma = 1.0 + 0.1 * jax.random.normal(kg_, (cout,), jnp.float32)
    beta = 0.1 * jax.random.normal(kbe_, (cout,), jnp.float32)
    running_mean = jnp.zeros((cout,), jnp.float32)
    running_var = jnp.ones((cout,), jnp.float32)
    s = gamma / jnp.sqrt(running_var + eps)
    b = s * (conv_b - running_mean) + beta
    return {"w": w.astype(jnp.bfloat16), "s": s, "b": b,
            "kh": kh, "kw": kw, "cin": cin, "cout": cout}


def init_params(key, in_channel):
    k = jax.random.split(key, 4)
    return {
        "branch2":   _conv_bn_params(k[0], 3, 3, in_channel, 384),  # 3x3 s2
        "branch3_1": _conv_bn_params(k[1], 1, 1, in_channel, 256),  # 1x1 s1
        "branch3_2": _conv_bn_params(k[2], 3, 3, 256, 256),         # 3x3 s1 p1
        "branch3_3": _conv_bn_params(k[3], 3, 3, 256, 384),         # 3x3 s2
    }


# -----------------------------------------------------------------------------
# Forward pass (matches ReductionA.forward)
# -----------------------------------------------------------------------------
def reduction_a(x_nchw, params):
    x = jnp.transpose(x_nchw, (0, 2, 3, 1)).astype(jnp.float32)   # NCHW -> NHWC
    N, H, W, Cin = x.shape
    xb = x.astype(jnp.bfloat16)

    # branch1: MaxPool2d(3, stride=2, pad=0) -- layout-only glue, negligible traffic
    pool = maxpool_3x3_s2(x)                                      # (N,Ho,Wo,Cin) f32

    # branch3 stem: 1x1/s1 -> 3x3/s1/p1 (fused matmul+BN+ReLU kernels, bf16 between)
    p = params["branch3_1"]
    t = matmul_affine(xb.reshape(N * H * W, Cin), p["w"], p["s"], p["b"])      # (M,256)
    t = t.reshape(N, H, W, 256)
    patches, _, _ = im2col(t, 3, 3, stride=1, pad=1)                           # (M,2304)
    p = params["branch3_2"]
    t = matmul_affine(patches, p["w"], p["s"], p["b"]).reshape(N, H, W, 256)

    # tail: branch2 (3x3/s2 on x) + branch3_3 (3x3/s2 on t) fused into one kernel
    b3_patches, Ho, Wo = im2col(t, 3, 3, stride=2, pad=0)                      # (Mo,2304)
    x_patches, _, _ = im2col(xb, 3, 3, stride=2, pad=0)                        # (Mo,9*Cin)
    p2, p3 = params["branch2"], params["branch3_3"]
    fused = dual_matmul_affine(x_patches, p2["w"], p2["s"], p2["b"],
                               b3_patches, p3["w"], p3["s"], p3["b"],
                               out_dtype=jnp.float32)                          # (Mo,768)

    fused = fused.reshape(N, Ho, Wo, 768)
    out_nhwc = jnp.concatenate([pool, fused], axis=-1)            # [pool | b2 | b3]
    return jnp.transpose(out_nhwc, (0, 3, 1, 2))                  # back to NCHW


# -----------------------------------------------------------------------------
# Pure-JAX reference (same folded params, same bf16 rounding points)
# -----------------------------------------------------------------------------
def _conv_bn_relu_ref(x_f32, p, stride, pad):
    kh, kw, cin = p["kh"], p["kw"], p["cin"]
    w4 = p["w"].astype(jnp.float32).reshape(kh, kw, cin, -1)
    y = jax.lax.conv_general_dilated(
        x_f32, w4, window_strides=(stride, stride),
        padding=[(pad, pad), (pad, pad)],
        dimension_numbers=("NHWC", "HWIO", "NHWC"),
        precision=jax.lax.Precision.HIGHEST)
    return jnp.maximum(y * p["s"] + p["b"], 0.0)


def _bf16_round(x):
    return x.astype(jnp.bfloat16).astype(jnp.float32)


def reduction_a_reference(x_nchw, params):
    x = jnp.transpose(x_nchw, (0, 2, 3, 1)).astype(jnp.float32)
    xb = _bf16_round(x)
    pool = maxpool_3x3_s2(x)
    b2 = _conv_bn_relu_ref(xb, params["branch2"], 2, 0)
    t = _bf16_round(_conv_bn_relu_ref(xb, params["branch3_1"], 1, 0))
    t = _bf16_round(_conv_bn_relu_ref(t, params["branch3_2"], 1, 1))
    b3 = _conv_bn_relu_ref(t, params["branch3_3"], 2, 0)
    out = jnp.concatenate([pool, b2, b3], axis=-1)
    return jnp.transpose(out, (0, 3, 1, 2))


# -----------------------------------------------------------------------------
if __name__ == "__main__":
    key = jax.random.PRNGKey(0)
    k_x, k_p = jax.random.split(key)

    # Small shapes consistent with the module: NCHW input, in_channel=4, 16x16.
    x = jax.random.normal(k_x, (2, 4, 16, 16), jnp.float32)
    params = init_params(k_p, in_channel=4)

    out = jax.block_until_ready(reduction_a(x, params))

    N, Cin, H, W = x.shape
    Ho = (H - 3) // 2 + 1
    Wo = (W - 3) // 2 + 1
    assert out.shape == (N, Cin + 384 + 384, Ho, Wo), out.shape
    assert bool(jnp.all(jnp.isfinite(out))), "non-finite output"
    # conv branches are ReLU'd; maxpool channels (first Cin) may be negative
    assert bool(jnp.all(out[:, Cin:] >= 0.0)), "ReLU violated on conv branches"

    ref = jax.block_until_ready(reduction_a_reference(x, params))
    max_err = float(jnp.max(jnp.abs(out - ref)))
    assert max_err < 5e-2, f"mismatch vs reference: max abs err {max_err}"

    print("KERNEL_OK")
</pallas_src>

<mosaic_0001>
module attributes {stable_mosaic.version = 11 : i64} {
  func.func @_mm_affine_kernel(%arg0: i32, %arg1: memref<512x4xbf16, #tpu.memory_space<vmem>>, %arg2: memref<4x256xbf16, #tpu.memory_space<vmem>>, %arg3: memref<1x256xf32, #tpu.memory_space<vmem>>, %arg4: memref<1x256xf32, #tpu.memory_space<vmem>>, %arg5: memref<512x256xbf16, #tpu.memory_space<vmem>>) attributes {dimension_semantics = [#tpu.dimension_semantics<parallel>], iteration_bounds = array<i64: 1>, scalar_prefetch = 0 : i64, scratch_operands = 0 : i64, tpu.core_type = #tpu.core_type<tc>, window_params = [{transform_indices = @transform_0, window_bounds = array<i64: 512, 4>}, {pipeline_mode = #tpu.pipeline_mode<synchronous>, transform_indices = @transform_1, window_bounds = array<i64: 4, 256>}, {pipeline_mode = #tpu.pipeline_mode<synchronous>, transform_indices = @transform_2, window_bounds = array<i64: 1, 256>}, {pipeline_mode = #tpu.pipeline_mode<synchronous>, transform_indices = @transform_3, window_bounds = array<i64: 1, 256>}, {transform_indices = @transform_4, window_bounds = array<i64: 512, 256>}]} {
    %c0 = arith.constant 0 : index
    %c0_0 = arith.constant 0 : index
    %0 = vector.load %arg1[%c0, %c0_0] : memref<512x4xbf16, #tpu.memory_space<vmem>>, vector<512x4xbf16>
    %c0_1 = arith.constant 0 : index
    %c0_2 = arith.constant 0 : index
    %1 = vector.load %arg2[%c0_1, %c0_2] : memref<4x256xbf16, #tpu.memory_space<vmem>>, vector<4x256xbf16>
    %cst = arith.constant dense<0.000000e+00> : vector<512x256xf32>
    %2 = tpu.matmul %0, %1, %cst {dimension_numbers = #tpu.dot_dimension_numbers<[1], [0], [0], [1], [0, 0, 1, 1], [], []>} : vector<512x4xbf16>, vector<4x256xbf16>, vector<512x256xf32> -> vector<512x256xf32>
    %c0_3 = arith.constant 0 : index
    %c0_4 = arith.constant 0 : index
    %3 = vector.load %arg3[%c0_3, %c0_4] : memref<1x256xf32, #tpu.memory_space<vmem>>, vector<1x256xf32>
    %4 = vector.broadcast %3 : vector<1x256xf32> to vector<512x256xf32>
    %5 = arith.mulf %2, %4 : vector<512x256xf32>
    %c0_5 = arith.constant 0 : index
    %c0_6 = arith.constant 0 : index
    %6 = vector.load %arg4[%c0_5, %c0_6] : memref<1x256xf32, #tpu.memory_space<vmem>>, vector<1x256xf32>
    %7 = vector.broadcast %6 : vector<1x256xf32> to vector<512x256xf32>
    %8 = arith.addf %5, %7 : vector<512x256xf32>
    %cst_7 = arith.constant 0.000000e+00 : f32
    %9 = vector.broadcast %cst_7 : f32 to vector<512x256xf32>
    %10 = arith.maximumf %8, %9 : vector<512x256xf32>
    %11 = arith.truncf %10 : vector<512x256xf32> to vector<512x256xbf16>
    %c0_8 = arith.constant 0 : index
    %c0_9 = arith.constant 0 : index
    %12 = vector.load %arg5[%c0_8, %c0_9] : memref<512x256xbf16, #tpu.memory_space<vmem>>, vector<512x256xbf16>
    tpu.vector_store %arg5[%c0_8, %c0_9], %11 {strides = array<i32>} : memref<512x256xbf16, #tpu.memory_space<vmem>>, vector<512x256xbf16>,
    return
  }
  func.func @transform_0(%arg0: i32) -> (i32, i32) {
    %c0_i32 = arith.constant 0 : i32
    %c0_i32_0 = arith.constant 0 : i32
    return %arg0, %c0_i32 : i32, i32
  }
  func.func @transform_1(%arg0: i32) -> (i32, i32) {
    %c0_i32 = arith.constant 0 : i32
    %c0_i32_0 = arith.constant 0 : i32
    %c0_i32_1 = arith.constant 0 : i32
    return %c0_i32, %c0_i32_0 : i32, i32
  }
  func.func @transform_2(%arg0: i32) -> (i32, i32) {
    %c0_i32 = arith.constant 0 : i32
    %c0_i32_0 = arith.constant 0 : i32
    %c0_i32_1 = arith.constant 0 : i32
    return %c0_i32, %c0_i32_0 : i32, i32
  }
  func.func @transform_3(%arg0: i32) -> (i32, i32) {
    %c0_i32 = arith.constant 0 : i32
    %c0_i32_0 = arith.constant 0 : i32
    %c0_i32_1 = arith.constant 0 : i32
    return %c0_i32, %c0_i32_0 : i32, i32
  }
  func.func @transform_4(%arg0: i32) -> (i32, i32) {
    %c0_i32 = arith.constant 0 : i32
    %c0_i32_0 = arith.constant 0 : i32
    return %arg0, %c0_i32 : i32, i32
  }
}

</mosaic_0001>

<llo_original>
// kernel: tpu_custom_call.1
$region0: #{tpu_custom_call.1}
  #allocation0 [shape = 'u32[]', space=smem, size = 0x4, offset = 0x4, fixed_abs, tag = 'smem constant byte address 0x4 - core index']
  #allocation1 [shape = 'u32[72,128]{1,0:T(1,128)}', space=vmem, size = 0x9000, scoped, tag = 'internal scratch']
  %s0 = inlined_call_operand.vmem [shape: bf16[512,4], index: 0, kind: input, shape index: {}]
  %s1 = inlined_call_operand.vmem [shape: bf16[4,256], index: 1, kind: input, shape index: {}]
  %s2 = inlined_call_operand.vmem [shape: f32[1,256], index: 2, kind: input, shape index: {}]
  %s3 = inlined_call_operand.vmem [shape: f32[1,256], index: 3, kind: input, shape index: {}]
  %s4 = inlined_call_operand.hbm [shape: bf16[512,256], index: 4, kind: output, shape index: {}]
  %s5 = sld [smem:[#allocation0]]
  $region26: #{tpu_custom_call.1} parent=0
    _
  %s7 = ssub.s32 1, %s5
  %s8 = scalar_select 0, %s7, %s5
  $region1: #{tpu_custom_call.1} parent=0
    #allocation2 [shape = 'u8[262144]{0}', space=vmem, size = 0x40000, scoped, tag = 'output window, operand 0, single buffered']
    #allocation3 [shape = 's32[1]{0}', space=sflag, size = 0x4, scoped, tag = 'scoped memory for tpu_custom_call.1']
    %9 = vsyncpa [#allocation3], 0
    // Predicated region
    $region2: #{tpu_custom_call.1} parent=1 // pred_check
      _
    $region3: #{tpu_custom_call.1} parent=1 // pred_check_branch
      %11 = sbr.rel (0) target = $region5
    $region4: #{tpu_custom_call.1} parent=1 // pred_region
      _
    $region5: #{tpu_custom_call.1} parent=1 // pred_fallthru
      _
    // Predicated region
    $region6: #{tpu_custom_call.1} parent=1 // pred_check
      _
    $region7: #{tpu_custom_call.1} parent=1 // pred_check_branch
      %13 = sbr.rel (0) target = $region9
    $region8: #{tpu_custom_call.1} parent=1 // pred_region
      _
    $region9: #{tpu_custom_call.1} parent=1 // pred_fallthru
      _
    // Predicated region
    $region10: #{tpu_custom_call.1} parent=1 // pred_check
      _
    $region11: #{tpu_custom_call.1} parent=1 // pred_check_branch
      %15 = sbr.rel (0) target = $region13
    $region12: #{tpu_custom_call.1} parent=1 // pred_region
      _
    $region13: #{tpu_custom_call.1} parent=1 // pred_fallthru
      _
    // Predicated region
    $region14: #{tpu_custom_call.1} parent=1 // pred_check
      _
    $region15: #{tpu_custom_call.1} parent=1 // pred_check_branch
      %17 = sbr.rel (0) target = $region17
    $region16: #{tpu_custom_call.1} parent=1 // pred_region
      _
    $region17: #{tpu_custom_call.1} parent=1 // pred_fallthru
      _
    %v19 = vld [vmem:[%s0] sm:$0xf]
    %v20 = vld [vmem:[%s0 + $0x4] sm:$0xf]
    %v21 = vld [vmem:[%s0 + $0x8] sm:$0xf]
    %v22 = vld [vmem:[%s0 + $0xc] sm:$0xf]
    %v23 = vld [vmem:[%s0 + $0x10] sm:$0xf]
    %v24 = vld [vmem:[%s0 + $0x14] sm:$0xf]
    %v25 = vld [vmem:[%s0 + $0x18] sm:$0xf]
    %v26 = vld [vmem:[%s0 + $0x1c] sm:$0xf]
    %v27 = vld [vmem:[%s0 + $0x20] sm:$0xf]
    %v28 = vld [vmem:[%s0 + $0x24] sm:$0xf]
    %v29 = vld [vmem:[%s0 + $0x28] sm:$0xf]
    %v30 = vld [vmem:[%s0 + $0x2c] sm:$0xf]
    %v31 = vld [vmem:[%s0 + $0x30] sm:$0xf]
    %v32 = vld [vmem:[%s0 + $0x34] sm:$0xf]
    %v33 = vld [vmem:[%s0 + $0x38] sm:$0xf]
    %v34 = vld [vmem:[%s0 + $0x3c] sm:$0xf]
    %v35 = vld [vmem:[%s0 + $0x40] sm:$0xf]
    %v36 = vld [vmem:[%s0 + $0x44] sm:$0xf]
    %v37 = vld [vmem:[%s0 + $0x48] sm:$0xf]
    %v38 = vld [vmem:[%s0 + $0x4c] sm:$0xf]
    %v39 = vld [vmem:[%s0 + $0x50] sm:$0xf]
    %v40 = vld [vmem:[%s0 + $0x54] sm:$0xf]
    %v41 = vld [vmem:[%s0 + $0x58] sm:$0xf]
    %v42 = vld [vmem:[%s0 + $0x5c] sm:$0xf]
    %v43 = vld [vmem:[%s0 + $0x60] sm:$0xf]
    %v44 = vld [vmem:[%s0 + $0x64] sm:$0xf]
    %v45 = vld [vmem:[%s0 + $0x68] sm:$0xf]
    %v46 = vld [vmem:[%s0 + $0x6c] sm:$0xf]
    %v47 = vld [vmem:[%s0 + $0x70] sm:$0xf]
    %v48 = vld [vmem:[%s0 + $0x74] sm:$0xf]
    %v49 = vld [vmem:[%s0 + $0x78] sm:$0xf]
    %v50 = vld [vmem:[%s0 + $0x7c] sm:$0xf]
    %v51 = vld [vmem:[%s0 + $0x80] sm:$0xf]
    %v52 = vld [vmem:[%s0 + $0x84] sm:$0xf]
    %v53 = vld [vmem:[%s0 + $0x88] sm:$0xf]
    %v54 = vld [vmem:[%s0 + $0x8c] sm:$0xf]
    %v55 = vld [vmem:[%s0 + $0x90] sm:$0xf]
    %v56 = vld [vmem:[%s0 + $0x94] sm:$0xf]
    %v57 = vld [vmem:[%s0 + $0x98] sm:$0xf]
    %v58 = vld [vmem:[%s0 + $0x9c] sm:$0xf]
    %v59 = vld [vmem:[%s0 + $0xa0] sm:$0xf]
    %v60 = vld [vmem:[%s0 + $0xa4] sm:$0xf]
    %v61 = vld [vmem:[%s0 + $0xa8] sm:$0xf]
    %v62 = vld [vmem:[%s0 + $0xac] sm:$0xf]
    %v63 = vld [vmem:[%s0 + $0xb0] sm:$0xf]
    %v64 = vld [vmem:[%s0 + $0xb4] sm:$0xf]
    %v65 = vld [vmem:[%s0 + $0xb8] sm:$0xf]
    %v66 = vld [vmem:[%s0 + $0xbc] sm:$0xf]
    %v67 = vld [vmem:[%s0 + $0xc0] sm:$0xf]
    %v68 = vld [vmem:[%s0 + $0xc4] sm:$0xf]
    %v69 = vld [vmem:[%s0 + $0xc8] sm:$0xf]
    %v70 = vld [vmem:[%s0 + $0xcc] sm:$0xf]
    %v71 = vld [vmem:[%s0 + $0xd0] sm:$0xf]
    %v72 = vld [vmem:[%s0 + $0xd4] sm:$0xf]
    %v73 = vld [vmem:[%s0 + $0xd8] sm:$0xf]
    %v74 = vld [vmem:[%s0 + $0xdc] sm:$0xf]
    %v75 = vld [vmem:[%s0 + $0xe0] sm:$0xf]
    %v76 = vld [vmem:[%s0 + $0xe4] sm:$0xf]
    %v77 = vld [vmem:[%s0 + $0xe8] sm:$0xf]
    %v78 = vld [vmem:[%s0 + $0xec] sm:$0xf]
    %v79 = vld [vmem:[%s0 + $0xf0] sm:$0xf]
    %v80 = vld [vmem:[%s0 + $0xf4] sm:$0xf]
    %v81 = vld [vmem:[%s0 + $0xf8] sm:$0xf]
    %v82 = vld [vmem:[%s0 + $0xfc] sm:$0xf]
    %v83 = vld [vmem:[%s1] sm:$0xf]
    %v148 = vunpack.c.l.b16 %v19
    %v149 = vunpack.c.l.b16 %v20
    %v150 = vunpack.c.l.b16 %v21
    %v151 = vunpack.c.l.b16 %v22
    %v152 = vunpack.c.l.b16 %v23
    %v153 = vunpack.c.l.b16 %v24
    %v154 = vunpack.c.l.b16 %v25
    %v155 = vunpack.c.l.b16 %v26
    %v156 = vunpack.c.l.b16 %v27
    %v157 = vunpack.c.l.b16 %v28
    %v158 = vunpack.c.l.b16 %v29
    %v159 = vunpack.c.l.b16 %v30
    %v160 = vunpack.c.l.b16 %v31
    %v161 = vunpack.c.l.b16 %v32
    %v162 = vunpack.c.l.b16 %v33
    %v163 = vunpack.c.l.b16 %v34
    %v164 = vunpack.c.l.b16 %v35
    %v165 = vunpack.c.l.b16 %v36
    %v166 = vunpack.c.l.b16 %v37
    %v167 = vunpack.c.l.b16 %v38
    %v168 = vunpack.c.l.b16 %v39
    %v169 = vunpack.c.l.b16 %v40
    %v170 = vunpack.c.l.b16 %v41
    %v171 = vunpack.c.l.b16 %v42
    %v172 = vunpack.c.l.b16 %v43
    %v173 = vunpack.c.l.b16 %v44
    %v174 = vunpack.c.l.b16 %v45
    %v175 = vunpack.c.l.b16 %v46
    %v176 = vunpack.c.l.b16 %v47
    %v177 = vunpack.c.l.b16 %v48
    %v178 = vunpack.c.l.b16 %v49
    %v179 = vunpack.c.l.b16 %v50
    %v180 = vunpack.c.l.b16 %v51
    %v181 = vunpack.c.l.b16 %v52
    %v182 = vunpack.c.l.b16 %v53
    %v183 = vunpack.c.l.b16 %v54
    %v184 = vunpack.c.l.b16 %v55
    %v185 = vunpack.c.l.b16 %v56
    %v186 = vunpack.c.l.b16 %v57
    %v187 = vunpack.c.l.b16 %v58
    %v188 = vunpack.c.l.b16 %v59
    %v189 = vunpack.c.l.b16 %v60
    %v190 = vunpack.c.l.b16 %v61
    %v191 = vunpack.c.l.b16 %v62
    %v192 = vunpack.c.l.b16 %v63
    %v193 = vunpack.c.l.b16 %v64
    %v194 = vunpack.c.l.b16 %v65
    %v195 = vunpack.c.l.b16 %v66
    %v196 = vunpack.c.l.b16 %v67
    %v197 = vunpack.c.l.b16 %v68
    %v198 = vunpack.c.l.b16 %v69
    %v199 = vunpack.c.l.b16 %v70
    %v200 = vunpack.c.l.b16 %v71
    %v201 = vunpack.c.l.b16 %v72
    %v202 = vunpack.c.l.b16 %v73
    %v203 = vunpack.c.l.b16 %v74
    %v204 = vunpack.c.l.b16 %v75
    %v205 = vunpack.c.l.b16 %v76
    %v206 = vunpack.c.l.b16 %v77
    %v207 = vunpack.c.l.b16 %v78
    %v208 = vunpack.c.l.b16 %v79
    %v209 = vunpack.c.l.b16 %v80
    %v210 = vunpack.c.l.b16 %v81
    %v211 = vunpack.c.l.b16 %v82
    %v212 = vpack.c.b16 %v149, %v148
    %v213 = vpack.c.b16 %v151, %v150
    %v214 = vpack.c.b16 %v153, %v152
    %v215 = vpack.c.b16 %v155, %v154
    %v216 = vpack.c.b16 %v157, %v156
    %v217 = vpack.c.b16 %v159, %v158
    %v218 = vpack.c.b16 %v161, %v160
    %v219 = vpack.c.b16 %v163, %v162
    %v220 = vpack.c.b16 %v165, %v164
    %v221 = vpack.c.b16 %v167, %v166
    %v222 = vpack.c.b16 %v169, %v168
    %v223 = vpack.c.b16 %v171, %v170
    %v224 = vpack.c.b16 %v173, %v172
    %v225 = vpack.c.b16 %v175, %v174
    %v226 = vpack.c.b16 %v177, %v176
    %v227 = vpack.c.b16 %v179, %v178
    %v228 = vpack.c.b16 %v181, %v180
    %v229 = vpack.c.b16 %v183, %v182
    %v230 = vpack.c.b16 %v185, %v184
    %v231 = vpack.c.b16 %v187, %v186
    %v232 = vpack.c.b16 %v189, %v188
    %v233 = vpack.c.b16 %v191, %v190
    %v234 = vpack.c.b16 %v193, %v192
    %v235 = vpack.c.b16 %v195, %v194
    %v236 = vpack.c.b16 %v197, %v196
    %v237 = vpack.c.b16 %v199, %v198
    %v238 = vpack.c.b16 %v201, %v200
    %v239 = vpack.c.b16 %v203, %v202
    %v240 = vpack.c.b16 %v205, %v204
    %v241 = vpack.c.b16 %v207, %v206
    %v242 = vpack.c.b16 %v209, %v208
    %v243 = vpack.c.b16 %v211, %v210
    %245 = vst [vmem:[#allocation1] ss:$4 sm:$0xff] %v83
    %v246 = vld.sshfl [vmem:[#allocation1] sm:$0xff pattern:$0x73625140]
    %v247 = vld.sshfl [vmem:[#allocation1 + $0x8] sm:$0xff pattern:$0x73625140]
    %vm248 = vcmask 31744
    %v250 = vsel %vm248, %v212, 0
    %v253 = vsel %vm248, %v213, 0
    %v256 = vsel %vm248, %v214, 0
    %v259 = vsel %vm248, %v215, 0
    %v262 = vsel %vm248, %v216, 0
    %v265 = vsel %vm248, %v217, 0
    %v268 = vsel %vm248, %v218, 0
    %v271 = vsel %vm248, %v219, 0
    %v274 = vsel %vm248, %v220, 0
    %v277 = vsel %vm248, %v221, 0
    %v280 = vsel %vm248, %v222, 0
    %v283 = vsel %vm248, %v223, 0
    %v286 = vsel %vm248, %v224, 0
    %v289 = vsel %vm248, %v225, 0
    %v292 = vsel %vm248, %v226, 0
    %v295 = vsel %vm248, %v227, 0
    %v298 = vsel %vm248, %v228, 0
    %v301 = vsel %vm248, %v229, 0
    %v304 = vsel %vm248, %v230, 0
    %v307 = vsel %vm248, %v231, 0
    %v310 = vsel %vm248, %v232, 0
    %v313 = vsel %vm248, %v233, 0
    %v316 = vsel %vm248, %v234, 0
    %v319 = vsel %vm248, %v235, 0
    %v322 = vsel %vm248, %v236, 0
    %v325 = vsel %vm248, %v237, 0
    %v328 = vsel %vm248, %v238, 0
    %v331 = vsel %vm248, %v239, 0
    %v334 = vsel %vm248, %v240, 0
    %v337 = vsel %vm248, %v241, 0
    %v340 = vsel %vm248, %v242, 0
    %v343 = vsel %vm248, %v243, 0
    %vm345 = vcmask 1041408
    %v346 = vsel %vm345, %v246, 0
    %v348 = vsel %vm345, %v247, 0
    %350 = vmatpush.bf16.msra.mxu0 0
    %351 = vmatpush.bf16.msra.mxu0 0
    %352 = vmatpush.bf16.msra.mxu0 0
    %353 = vmatpush.bf16.msra.mxu0 0
    %354 = vmatpush.bf16.msra.mxu0 0
    %355 = vmatpush.bf16.msra.mxu0 0
    %356 = vmatpush.bf16.msra.mxu0 0
    %357 = vmatpush.bf16.msra.mxu0 %v346
    %358 = vmatmul.bf16.gmra.mxu0 %v250
    %v359 = vpop.f32.mrf.mxu0
    %v360 = vadd.f32 0.0, %v359
    %v361 = vpop.f32.mrf.mxu0
    %v362 = vadd.f32 0.0, %v361
    %363 = vmatmul.bf16.gmra.mxu0 %v253
    %v364 = vpop.f32.mrf.mxu0
    %v365 = vadd.f32 0.0, %v364
    %v366 = vpop.f32.mrf.mxu0
    %v367 = vadd.f32 0.0, %v366
    %368 = vmatmul.bf16.gmra.mxu0 %v256
    %v369 = vpop.f32.mrf.mxu0
    %v370 = vadd.f32 0.0, %v369
    %v371 = vpop.f32.mrf.mxu0
    %v372 = vadd.f32 0.0, %v371
    %373 = vmatmul.bf16.gmra.mxu0 %v259
    %v374 = vpop.f32.mrf.mxu0
    %v375 = vadd.f32 0.0, %v374
    %v376 = vpop.f32.mrf.mxu0
    %v377 = vadd.f32 0.0, %v376
    %378 = vmatmul.bf16.gmra.mxu0 %v262
    %v379 = vpop.f32.mrf.mxu0
    %v380 = vadd.f32 0.0, %v379
    %v381 = vpop.f32.mrf.mxu0
    %v382 = vadd.f32 0.0, %v381
    %383 = vmatmul.bf16.gmra.mxu0 %v265
    %v384 = vpop.f32.mrf.mxu0
    %v385 = vadd.f32 0.0, %v384
    %v386 = vpop.f32.mrf.mxu0
    %v387 = vadd.f32 0.0, %v386
    %388 = vmatmul.bf16.gmra.mxu0 %v268
    %v389 = vpop.f32.mrf.mxu0
    %v390 = vadd.f32 0.0, %v389
    %v391 = vpop.f32.mrf.mxu0
    %v392 = vadd.f32 0.0, %v391
    %393 = vmatmul.bf16.gmra.mxu0 %v271
    %v394 = vpop.f32.mrf.mxu0
    %v395 = vadd.f32 0.0, %v394
    %v396 = vpop.f32.mrf.mxu0
    %v397 = vadd.f32 0.0, %v396
    %398 = vmatmul.bf16.gmra.mxu0 %v274
    %v399 = vpop.f32.mrf.mxu0
    %v400 = vadd.f32 0.0, %v399
    %v401 = vpop.f32.mrf.mxu0
    %v402 = vadd.f32 0.0, %v401
    %403 = vmatmul.bf16.gmra.mxu0 %v277
    %v404 = vpop.f32.mrf.mxu0
    %v405 = vadd.f32 0.0, %v404
    %v406 = vpop.f32.mrf.mxu0
    %v407 = vadd.f32 0.0, %v406
    %408 = vmatmul.bf16.gmra.mxu0 %v280
    %v409 = vpop.f32.mrf.mxu0
    %v410 = vadd.f32 0.0, %v409
    %v411 = vpop.f32.mrf.mxu0
    %v412 = vadd.f32 0.0, %v411
    %413 = vmatmul.bf16.gmra.mxu0 %v283
    %v414 = vpop.f32.mrf.mxu0
    %v415 = vadd.f32 0.0, %v414
    %v416 = vpop.f32.mrf.mxu0
    %v417 = vadd.f32 0.0, %v416
    %418 = vmatmul.bf16.gmra.mxu0 %v286
    %v419 = vpop.f32.mrf.mxu0
    %v420 = vadd.f32 0.0, %v419
    %v421 = vpop.f32.mrf.mxu0
    %v422 = vadd.f32 0.0, %v421
    %423 = vmatmul.bf16.gmra.mxu0 %v289
    %v424 = vpop.f32.mrf.mxu0
    %v425 = vadd.f32 0.0, %v424
    %v426 = vpop.f32.mrf.mxu0
    %v427 = vadd.f32 0.0, %v426
    %428 = vmatmul.bf16.gmra.mxu0 %v292
    %v429 = vpop.f32.mrf.mxu0
    %v430 = vadd.f32 0.0, %v429
    %v431 = vpop.f32.mrf.mxu0
    %v432 = vadd.f32 0.0, %v431
    %433 = vmatmul.bf16.gmra.mxu0 %v295
    %v434 = vpop.f32.mrf.mxu0
    %v435 = vadd.f32 0.0, %v434
    %v436 = vpop.f32.mrf.mxu0
    %v437 = vadd.f32 0.0, %v436
    %438 = vmatmul.bf16.gmra.mxu0 %v298
    %v439 = vpop.f32.mrf.mxu0
    %v440 = vadd.f32 0.0, %v439
    %v441 = vpop.f32.mrf.mxu0
    %v442 = vadd.f32 0.0, %v441
    %443 = vmatmul.bf16.gmra.mxu0 %v301
    %v444 = vpop.f32.mrf.mxu0
    %v445 = vadd.f32 0.0, %v444
    %v446 = vpop.f32.mrf.mxu0
    %v447 = vadd.f32 0.0, %v446
    %448 = vmatmul.bf16.gmra.mxu0 %v304
    %v449 = vpop.f32.mrf.mxu0
    %v450 = vadd.f32 0.0, %v449
    %v451 = vpop.f32.mrf.mxu0
    %v452 = vadd.f32 0.0, %v451
    %453 = vmatmul.bf16.gmra.mxu0 %v307
    %v454 = vpop.f32.mrf.mxu0
    %v455 = vadd.f32 0.0, %v454
    %v456 = vpop.f32.mrf.mxu0
    %v457 = vadd.f32 0.0, %v456
    %458 = vmatmul.bf16.gmra.mxu0 %v310
    %v459 = vpop.f32.mrf.mxu0
    %v460 = vadd.f32 0.0, %v459
    %v461 = vpop.f32.mrf.mxu0
    %v462 = vadd.f32 0.0, %v461
    %463 = vmatmul.bf16.gmra.mxu0 %v313
    %v464 = vpop.f32.mrf.mxu0
    %v465 = vadd.f32 0.0, %v464
    %v466 = vpop.f32.mrf.mxu0
    %v467 = vadd.f32 0.0, %v466
    %468 = vmatmul.bf16.gmra.mxu0 %v316
    %v469 = vpop.f32.mrf.mxu0
    %v470 = vadd.f32 0.0, %v469
    %v471 = vpop.f32.mrf.mxu0
    %v472 = vadd.f32 0.0, %v471
    %473 = vmatmul.bf16.gmra.mxu0 %v319
    %v474 = vpop.f32.mrf.mxu0
    %v475 = vadd.f32 0.0, %v474
    %v476 = vpop.f32.mrf.mxu0
    %v477 = vadd.f32 0.0, %v476
    %478 = vmatmul.bf16.gmra.mxu0 %v322
    %v479 = vpop.f32.mrf.mxu0
    %v480 = vadd.f32 0.0, %v479
    %v481 = vpop.f32.mrf.mxu0
    %v482 = vadd.f32 0.0, %v481
    %483 = vmatmul.bf16.gmra.mxu0 %v325
    %v484 = vpop.f32.mrf.mxu0
    %v485 = vadd.f32 0.0, %v484
    %v486 = vpop.f32.mrf.mxu0
    %v487 = vadd.f32 0.0, %v486
    %488 = vmatmul.bf16.gmra.mxu0 %v328
    %v489 = vpop.f32.mrf.mxu0
    %v490 = vadd.f32 0.0, %v489
    %v491 = vpop.f32.mrf.mxu0
    %v492 = vadd.f32 0.0, %v491
    %493 = vmatmul.bf16.gmra.mxu0 %v331
    %v494 = vpop.f32.mrf.mxu0
    %v495 = vadd.f32 0.0, %v494
    %v496 = vpop.f32.mrf.mxu0
    %v497 = vadd.f32 0.0, %v496
    %498 = vmatmul.bf16.gmra.mxu0 %v334
    %v499 = vpop.f32.mrf.mxu0
    %v500 = vadd.f32 0.0, %v499
    %v501 = vpop.f32.mrf.mxu0
    %v502 = vadd.f32 0.0, %v501
    %503 = vmatmul.bf16.gmra.mxu0 %v337
    %v504 = vpop.f32.mrf.mxu0
    %v505 = vadd.f32 0.0, %v504
    %v506 = vpop.f32.mrf.mxu0
    %v507 = vadd.f32 0.0, %v506
    %508 = vmatmul.bf16.gmra.mxu0 %v340
    %v509 = vpop.f32.mrf.mxu0
    %v510 = vadd.f32 0.0, %v509
    %v511 = vpop.f32.mrf.mxu0
    %v512 = vadd.f32 0.0, %v511
    %513 = vmatmul.bf16.gmra.mxu0 %v343
    %v514 = vpop.f32.mrf.mxu0
    %v515 = vadd.f32 0.0, %v514
    %v516 = vpop.f32.mrf.mxu0
    %v517 = vadd.f32 0.0, %v516
    %518 = vdwg.mxu0
    %519 = vmatpush.bf16.msra.mxu0 0
    %520 = vmatpush.bf16.msra.mxu0 0
    %521 = vmatpush.bf16.msra.mxu0 0
    %522 = vmatpush.bf16.msra.mxu0 0
    %523 = vmatpush.bf16.msra.mxu0 0
    %524 = vmatpush.bf16.msra.mxu0 0
    %525 = vmatpush.bf16.msra.mxu0 0
    %526 = vmatpush.bf16.msra.mxu0 %v348
    %527 = vmatmul.bf16.gmra.mxu0 %v250
    %v528 = vpop.f32.mrf.mxu0
    %v529 = vadd.f32 0.0, %v528
    %v530 = vpop.f32.mrf.mxu0
    %v531 = vadd.f32 0.0, %v530
    %532 = vmatmul.bf16.gmra.mxu0 %v253
    %v533 = vpop.f32.mrf.mxu0
    %v534 = vadd.f32 0.0, %v533
    %v535 = vpop.f32.mrf.mxu0
    %v536 = vadd.f32 0.0, %v535
    %537 = vmatmul.bf16.gmra.mxu0 %v256
    %v538 = vpop.f32.mrf.mxu0
    %v539 = vadd.f32 0.0, %v538
    %v540 = vpop.f32.mrf.mxu0
    %v541 = vadd.f32 0.0, %v540
    %542 = vmatmul.bf16.gmra.mxu0 %v259
    %v543 = vpop.f32.mrf.mxu0
    %v544 = vadd.f32 0.0, %v543
    %v545 = vpop.f32.mrf.mxu0
    %v546 = vadd.f32 0.0, %v545
    %547 = vmatmul.bf16.gmra.mxu0 %v262
    %v548 = vpop.f32.mrf.mxu0
    %v549 = vadd.f32 0.0, %v548
    %v550 = vpop.f32.mrf.mxu0
    %v551 = vadd.f32 0.0, %v550
    %552 = vmatmul.bf16.gmra.mxu0 %v265
    %v553 = vpop.f32.mrf.mxu0
    %v554 = vadd.f32 0.0, %v553
    %v555 = vpop.f32.mrf.mxu0
    %v556 = vadd.f32 0.0, %v555
    %557 = vmatmul.bf16.gmra.mxu0 %v268
    %v558 = vpop.f32.mrf.mxu0
    %v559 = vadd.f32 0.0, %v558
    %v560 = vpop.f32.mrf.mxu0
    %v561 = vadd.f32 0.0, %v560
    %562 = vmatmul.bf16.gmra.mxu0 %v271
    %v563 = vpop.f32.mrf.mxu0
    %v564 = vadd.f32 0.0, %v563
    %v565 = vpop.f32.mrf.mxu0
    %v566 = vadd.f32 0.0, %v565
    %567 = vmatmul.bf16.gmra.mxu0 %v274
    %v568 = vpop.f32.mrf.mxu0
    %v569 = vadd.f32 0.0, %v568
    %v570 = vpop.f32.mrf.mxu0
    %v571 = vadd.f32 0.0, %v570
    %572 = vmatmul.bf16.gmra.mxu0 %v277
    %v573 = vpop.f32.mrf.mxu0
    %v574 = vadd.f32 0.0, %v573
    %v575 = vpop.f32.mrf.mxu0
    %v576 = vadd.f32 0.0, %v575
    %577 = vmatmul.bf16.gmra.mxu0 %v280
    %v578 = vpop.f32.mrf.mxu0
    %v579 = vadd.f32 0.0, %v578
    %v580 = vpop.f32.mrf.mxu0
    %v581 = vadd.f32 0.0, %v580
    %582 = vmatmul.bf16.gmra.mxu0 %v283
    %v583 = vpop.f32.mrf.mxu0
    %v584 = vadd.f32 0.0, %v583
    %v585 = vpop.f32.mrf.mxu0
    %v586 = vadd.f32 0.0, %v585
    %587 = vmatmul.bf16.gmra.mxu0 %v286
    %v588 = vpop.f32.mrf.mxu0
    %v589 = vadd.f32 0.0, %v588
    %v590 = vpop.f32.mrf.mxu0
    %v591 = vadd.f32 0.0, %v590
    %592 = vmatmul.bf16.gmra.mxu0 %v289
    %v593 = vpop.f32.mrf.mxu0
    %v594 = vadd.f32 0.0, %v593
    %v595 = vpop.f32.mrf.mxu0
    %v596 = vadd.f32 0.0, %v595
    %597 = vmatmul.bf16.gmra.mxu0 %v292
    %v598 = vpop.f32.mrf.mxu0
    %v599 = vadd.f32 0.0, %v598
    %v600 = vpop.f32.mrf.mxu0
    %v601 = vadd.f32 0.0, %v600
    %602 = vmatmul.bf16.gmra.mxu0 %v295
    %v603 = vpop.f32.mrf.mxu0
    %v604 = vadd.f32 0.0, %v603
    %v605 = vpop.f32.mrf.mxu0
    %v606 = vadd.f32 0.0, %v605
    %607 = vmatmul.bf16.gmra.mxu0 %v298
    %v608 = vpop.f32.mrf.mxu0
    %v609 = vadd.f32 0.0, %v608
    %v610 = vpop.f32.mrf.mxu0
    %v611 = vadd.f32 0.0, %v610
    %612 = vmatmul.bf16.gmra.mxu0 %v301
    %v613 = vpop.f32.mrf.mxu0
    %v614 = vadd.f32 0.0, %v613
    %v615 = vpop.f32.mrf.mxu0
    %v616 = vadd.f32 0.0, %v615
    %617 = vmatmul.bf16.gmra.mxu0 %v304
    %v618 = vpop.f32.mrf.mxu0
    %v619 = vadd.f32 0.0, %v618
    %v620 = vpop.f32.mrf.mxu0
    %v621 = vadd.f32 0.0, %v620
    %622 = vmatmul.bf16.gmra.mxu0 %v307
    %v623 = vpop.f32.mrf.mxu0
    %v624 = vadd.f32 0.0, %v623
    %v625 = vpop.f32.mrf.mxu0
    %v626 = vadd.f32 0.0, %v625
    %627 = vmatmul.bf16.gmra.mxu0 %v310
    %v628 = vpop.f32.mrf.mxu0
    %v629 = vadd.f32 0.0, %v628
    %v630 = vpop.f32.mrf.mxu0
    %v631 = vadd.f32 0.0, %v630
    %632 = vmatmul.bf16.gmra.mxu0 %v313
    %v633 = vpop.f32.mrf.mxu0
    %v634 = vadd.f32 0.0, %v633
    %v635 = vpop.f32.mrf.mxu0
    %v636 = vadd.f32 0.0, %v635
    %637 = vmatmul.bf16.gmra.mxu0 %v316
    %v638 = vpop.f32.mrf.mxu0
    %v639 = vadd.f32 0.0, %v638
    %v640 = vpop.f32.mrf.mxu0
    %v641 = vadd.f32 0.0, %v640
    %642 = vmatmul.bf16.gmra.mxu0 %v319
    %v643 = vpop.f32.mrf.mxu0
    %v644 = vadd.f32 0.0, %v643
    %v645 = vpop.f32.mrf.mxu0
    %v646 = vadd.f32 0.0, %v645
    %647 = vmatmul.bf16.gmra.mxu0 %v322
    %v648 = vpop.f32.mrf.mxu0
    %v649 = vadd.f32 0.0, %v648
    %v650 = vpop.f32.mrf.mxu0
    %v651 = vadd.f32 0.0, %v650
    %652 = vmatmul.bf16.gmra.mxu0 %v325
    %v653 = vpop.f32.mrf.mxu0
    %v654 = vadd.f32 0.0, %v653
    %v655 = vpop.f32.mrf.mxu0
    %v656 = vadd.f32 0.0, %v655
    %657 = vmatmul.bf16.gmra.mxu0 %v328
    %v658 = vpop.f32.mrf.mxu0
    %v659 = vadd.f32 0.0, %v658
    %v660 = vpop.f32.mrf.mxu0
    %v661 = vadd.f32 0.0, %v660
    %662 = vmatmul.bf16.gmra.mxu0 %v331
    %v663 = vpop.f32.mrf.mxu0
    %v664 = vadd.f32 0.0, %v663
    %v665 = vpop.f32.mrf.mxu0
    %v666 = vadd.f32 0.0, %v665
    %667 = vmatmul.bf16.gmra.mxu0 %v334
    %v668 = vpop.f32.mrf.mxu0
    %v669 = vadd.f32 0.0, %v668
    %v670 = vpop.f32.mrf.mxu0
    %v671 = vadd.f32 0.0, %v670
    %672 = vmatmul.bf16.gmra.mxu0 %v337
    %v673 = vpop.f32.mrf.mxu0
    %v674 = vadd.f32 0.0, %v673
    %v675 = vpop.f32.mrf.mxu0
    %v676 = vadd.f32 0.0, %v675
    %677 = vmatmul.bf16.gmra.mxu0 %v340
    %v678 = vpop.f32.mrf.mxu0
    %v679 = vadd.f32 0.0, %v678
    %v680 = vpop.f32.mrf.mxu0
    %v681 = vadd.f32 0.0, %v680
    %682 = vmatmul.bf16.gmra.mxu0 %v343
    %v683 = vpop.f32.mrf.mxu0
    %v684 = vadd.f32 0.0, %v683
    %v685 = vpop.f32.mrf.mxu0
    %v686 = vadd.f32 0.0, %v685
    %687 = vdwg.mxu0
    %v688 = vld [vmem:[%s2] sm:$0x3]
    %v690 = vperm.slane %v688, 0
    %v691 = vperm.slane %v688, 1
    %v694 = vmul.f32 %v360, %v690
    %v695 = vmul.f32 %v529, %v691
    %v696 = vmul.f32 %v362, %v690
    %v697 = vmul.f32 %v531, %v691
    %v698 = vmul.f32 %v365, %v690
    %v699 = vmul.f32 %v534, %v691
    %v700 = vmul.f32 %v367, %v690
    %v701 = vmul.f32 %v536, %v691
    %v702 = vmul.f32 %v370, %v690
    %v703 = vmul.f32 %v539, %v691
    %v704 = vmul.f32 %v372, %v690
    %v705 = vmul.f32 %v541, %v691
    %v706 = vmul.f32 %v375, %v690
    %v707 = vmul.f32 %v544, %v691
    %v708 = vmul.f32 %v377, %v690
    %v709 = vmul.f32 %v546, %v691
    %v710 = vmul.f32 %v380, %v690
    %v711 = vmul.f32 %v549, %v691
    %v712 = vmul.f32 %v382, %v690
    %v713 = vmul.f32 %v551, %v691
    %v714 = vmul.f32 %v385, %v690
    %v715 = vmul.f32 %v554, %v691
    %v716 = vmul.f32 %v387, %v690
    %v717 = vmul.f32 %v556, %v691
    %v718 = vmul.f32 %v390, %v690
    %v719 = vmul.f32 %v559, %v691
    %v720 = vmul.f32 %v392, %v690
    %v721 = vmul.f32 %v561, %v691
    %v722 = vmul.f32 %v395, %v690
    %v723 = vmul.f32 %v564, %v691
    %v724 = vmul.f32 %v397, %v690
    %v725 = vmul.f32 %v566, %v691
    %v726 = vmul.f32 %v400, %v690
    %v727 = vmul.f32 %v569, %v691
    %v728 = vmul.f32 %v402, %v690
    %v729 = vmul.f32 %v571, %v691
    %v730 = vmul.f32 %v405, %v690
    %v731 = vmul.f32 %v574, %v691
    %v732 = vmul.f32 %v407, %v690
    %v733 = vmul.f32 %v576, %v691
    %v734 = vmul.f32 %v410, %v690
    %v735 = vmul.f32 %v579, %v691
    %v736 = vmul.f32 %v412, %v690
    %v737 = vmul.f32 %v581, %v691
    %v738 = vmul.f32 %v415, %v690
    %v739 = vmul.f32 %v584, %v691
    %v740 = vmul.f32 %v417, %v690
    %v741 = vmul.f32 %v586, %v691
    %v742 = vmul.f32 %v420, %v690
    %v743 = vmul.f32 %v589, %v691
    %v744 = vmul.f32 %v422, %v690
    %v745 = vmul.f32 %v591, %v691
    %v746 = vmul.f32 %v425, %v690
    %v747 = vmul.f32 %v594, %v691
    %v748 = vmul.f32 %v427, %v690
    %v749 = vmul.f32 %v596, %v691
    %v750 = vmul.f32 %v430, %v690
    %v751 = vmul.f32 %v599, %v691
    %v752 = vmul.f32 %v432, %v690
    %v753 = vmul.f32 %v601, %v691
    %v754 = vmul.f32 %v435, %v690
    %v755 = vmul.f32 %v604, %v691
    %v756 = vmul.f32 %v437, %v690
    %v757 = vmul.f32 %v606, %v691
    %v758 = vmul.f32 %v440, %v690
    %v759 = vmul.f32 %v609, %v691
    %v760 = vmul.f32 %v442, %v690
    %v761 = vmul.f32 %v611, %v691
    %v762 = vmul.f32 %v445, %v690
    %v763 = vmul.f32 %v614, %v691
    %v764 = vmul.f32 %v447, %v690
    %v765 = vmul.f32 %v616, %v691
    %v766 = vmul.f32 %v450, %v690
    %v767 = vmul.f32 %v619, %v691
    %v768 = vmul.f32 %v452, %v690
    %v769 = vmul.f32 %v621, %v691
    %v770 = vmul.f32 %v455, %v690
    %v771 = vmul.f32 %v624, %v691
    %v772 = vmul.f32 %v457, %v690
    %v773 = vmul.f32 %v626, %v691
    %v774 = vmul.f32 %v460, %v690
    %v775 = vmul.f32 %v629, %v691
    %v776 = vmul.f32 %v462, %v690
    %v777 = vmul.f32 %v631, %v691
    %v778 = vmul.f32 %v465, %v690
    %v779 = vmul.f32 %v634, %v691
    %v780 = vmul.f32 %v467, %v690
    %v781 = vmul.f32 %v636, %v691
    %v782 = vmul.f32 %v470, %v690
    %v783 = vmul.f32 %v639, %v691
    %v784 = vmul.f32 %v472, %v690
    %v785 = vmul.f32 %v641, %v691
    %v786 = vmul.f32 %v475, %v690
    %v787 = vmul.f32 %v644, %v691
    %v788 = vmul.f32 %v477, %v690
    %v789 = vmul.f32 %v646, %v691
    %v790 = vmul.f32 %v480, %v690
    %v791 = vmul.f32 %v649, %v691
    %v792 = vmul.f32 %v482, %v690
    %v793 = vmul.f32 %v651, %v691
    %v794 = vmul.f32 %v485, %v690
    %v795 = vmul.f32 %v654, %v691
    %v796 = vmul.f32 %v487, %v690
    %v797 = vmul.f32 %v656, %v691
    %v798 = vmul.f32 %v490, %v690
    %v799 = vmul.f32 %v659, %v691
    %v800 = vmul.f32 %v492, %v690
    %v801 = vmul.f32 %v661, %v691
    %v802 = vmul.f32 %v495, %v690
    %v803 = vmul.f32 %v664, %v691
    %v804 = vmul.f32 %v497, %v690
    %v805 = vmul.f32 %v666, %v691
    %v806 = vmul.f32 %v500, %v690
    %v807 = vmul.f32 %v669, %v691
    %v808 = vmul.f32 %v502, %v690
    %v809 = vmul.f32 %v671, %v691
    %v810 = vmul.f32 %v505, %v690
    %v811 = vmul.f32 %v674, %v691
    %v812 = vmul.f32 %v507, %v690
    %v813 = vmul.f32 %v676, %v691
    %v814 = vmul.f32 %v510, %v690
    %v815 = vmul.f32 %v679, %v691
    %v816 = vmul.f32 %v512, %v690
    %v817 = vmul.f32 %v681, %v691
    %v818 = vmul.f32 %v515, %v690
    %v819 = vmul.f32 %v684, %v691
    %v820 = vmul.f32 %v517, %v690
    %v821 = vmul.f32 %v686, %v691
    %v822 = vld [vmem:[%s3] sm:$0x3]
    %v824 = vperm.slane %v822, 0
    %v825 = vperm.slane %v822, 1
    %v828 = vadd.f32 %v694, %v824
    %v829 = vadd.f32 %v695, %v825
    %v830 = vadd.f32 %v696, %v824
    %v831 = vadd.f32 %v697, %v825
    %v832 = vadd.f32 %v698, %v824
    %v833 = vadd.f32 %v699, %v825
    %v834 = vadd.f32 %v700, %v824
    %v835 = vadd.f32 %v701, %v825
    %v836 = vadd.f32 %v702, %v824
    %v837 = vadd.f32 %v703, %v825
    %v838 = vadd.f32 %v704, %v824
    %v839 = vadd.f32 %v705, %v825
    %v840 = vadd.f32 %v706, %v824
    %v841 = vadd.f32 %v707, %v825
    %v842 = vadd.f32 %v708, %v824
    %v843 = vadd.f32 %v709, %v825
    %v844 = vadd.f32 %v710, %v824
    %v845 = vadd.f32 %v711, %v825
    %v846 = vadd.f32 %v712, %v824
    %v847 = vadd.f32 %v713, %v825
    %v848 = vadd.f32 %v714, %v824
    %v849 = vadd.f32 %v715, %v825
    %v850 = vadd.f32 %v716, %v824
    %v851 = vadd.f32 %v717, %v825
    %v852 = vadd.f32 %v718, %v824
    %v853 = vadd.f32 %v719, %v825
    %v854 = vadd.f32 %v720, %v824
    %v855 = vadd.f32 %v721, %v825
    %v856 = vadd.f32 %v722, %v824
    %v857 = vadd.f32 %v723, %v825
    %v858 = vadd.f32 %v724, %v824
    %v859 = vadd.f32 %v725, %v825
    %v860 = vadd.f32 %v726, %v824
    %v861 = vadd.f32 %v727, %v825
    %v862 = vadd.f32 %v728, %v824
    %v863 = vadd.f32 %v729, %v825
    %v864 = vadd.f32 %v730, %v824
    %v865 = vadd.f32 %v731, %v825
    %v866 = vadd.f32 %v732, %v824
    %v867 = vadd.f32 %v733, %v825
    %v868 = vadd.f32 %v734, %v824
    %v869 = vadd.f32 %v735, %v825
    %v870 = vadd.f32 %v736, %v824
    %v871 = vadd.f32 %v737, %v825
    %v872 = vadd.f32 %v738, %v824
    %v873 = vadd.f32 %v739, %v825
    %v874 = vadd.f32 %v740, %v824
    %v875 = vadd.f32 %v741, %v825
    %v876 = vadd.f32 %v742, %v824
    %v877 = vadd.f32 %v743, %v825
    %v878 = vadd.f32 %v744, %v824
    %v879 = vadd.f32 %v745, %v825
    %v880 = vadd.f32 %v746, %v824
    %v881 = vadd.f32 %v747, %v825
    %v882 = vadd.f32 %v748, %v824
    %v883 = vadd.f32 %v749, %v825
    %v884 = vadd.f32 %v750, %v824
    %v885 = vadd.f32 %v751, %v825
    %v886 = vadd.f32 %v752, %v824
    %v887 = vadd.f32 %v753, %v825
    %v888 = vadd.f32 %v754, %v824
    %v889 = vadd.f32 %v755, %v825
    %v890 = vadd.f32 %v756, %v824
    %v891 = vadd.f32 %v757, %v825
    %v892 = vadd.f32 %v758, %v824
    %v893 = vadd.f32 %v759, %v825
    %v894 = vadd.f32 %v760, %v824
    %v895 = vadd.f32 %v761, %v825
    %v896 = vadd.f32 %v762, %v824
    %v897 = vadd.f32 %v763, %v825
    %v898 = vadd.f32 %v764, %v824
    %v899 = vadd.f32 %v765, %v825
    %v900 = vadd.f32 %v766, %v824
    %v901 = vadd.f32 %v767, %v825
    %v902 = vadd.f32 %v768, %v824
    %v903 = vadd.f32 %v769, %v825
    %v904 = vadd.f32 %v770, %v824
    %v905 = vadd.f32 %v771, %v825
    %v906 = vadd.f32 %v772, %v824
    %v907 = vadd.f32 %v773, %v825
    %v908 = vadd.f32 %v774, %v824
    %v909 = vadd.f32 %v775, %v825
    %v910 = vadd.f32 %v776, %v824
    %v911 = vadd.f32 %v777, %v825
    %v912 = vadd.f32 %v778, %v824
    %v913 = vadd.f32 %v779, %v825
    %v914 = vadd.f32 %v780, %v824
    %v915 = vadd.f32 %v781, %v825
    %v916 = vadd.f32 %v782, %v824
    %v917 = vadd.f32 %v783, %v825
    %v918 = vadd.f32 %v784, %v824
    %v919 = vadd.f32 %v785, %v825
    %v920 = vadd.f32 %v786, %v824
    %v921 = vadd.f32 %v787, %v825
    %v922 = vadd.f32 %v788, %v824
    %v923 = vadd.f32 %v789, %v825
    %v924 = vadd.f32 %v790, %v824
    %v925 = vadd.f32 %v791, %v825
    %v926 = vadd.f32 %v792, %v824
    %v927 = vadd.f32 %v793, %v825
    %v928 = vadd.f32 %v794, %v824
    %v929 = vadd.f32 %v795, %v825
    %v930 = vadd.f32 %v796, %v824
    %v931 = vadd.f32 %v797, %v825
    %v932 = vadd.f32 %v798, %v824
    %v933 = vadd.f32 %v799, %v825
    %v934 = vadd.f32 %v800, %v824
    %v935 = vadd.f32 %v801, %v825
    %v936 = vadd.f32 %v802, %v824
    %v937 = vadd.f32 %v803, %v825
    %v938 = vadd.f32 %v804, %v824
    %v939 = vadd.f32 %v805, %v825
    %v940 = vadd.f32 %v806, %v824
    %v941 = vadd.f32 %v807, %v825
    %v942 = vadd.f32 %v808, %v824
    %v943 = vadd.f32 %v809, %v825
    %v944 = vadd.f32 %v810, %v824
    %v945 = vadd.f32 %v811, %v825
    %v946 = vadd.f32 %v812, %v824
    %v947 = vadd.f32 %v813, %v825
    %v948 = vadd.f32 %v814, %v824
    %v949 = vadd.f32 %v815, %v825
    %v950 = vadd.f32 %v816, %v824
    %v951 = vadd.f32 %v817, %v825
    %v952 = vadd.f32 %v818, %v824
    %v953 = vadd.f32 %v819, %v825
    %v954 = vadd.f32 %v820, %v824
    %v955 = vadd.f32 %v821, %v825
    %v956 = vmax.f32 %v828, 0.0
    %v957 = vmax.f32 %v829, 0.0
    %v958 = vmax.f32 %v830, 0.0
    %v959 = vmax.f32 %v831, 0.0
    %v960 = vmax.f32 %v832, 0.0
    %v961 = vmax.f32 %v833, 0.0
    %v962 = vmax.f32 %v834, 0.0
    %v963 = vmax.f32 %v835, 0.0
    %v964 = vmax.f32 %v836, 0.0
    %v965 = vmax.f32 %v837, 0.0
    %v966 = vmax.f32 %v838, 0.0
    %v967 = vmax.f32 %v839, 0.0
    %v968 = vmax.f32 %v840, 0.0
    %v969 = vmax.f32 %v841, 0.0
    %v970 = vmax.f32 %v842, 0.0
    %v971 = vmax.f32 %v843, 0.0
    %v972 = vmax.f32 %v844, 0.0
    %v973 = vmax.f32 %v845, 0.0
    %v974 = vmax.f32 %v846, 0.0
    %v975 = vmax.f32 %v847, 0.0
    %v976 = vmax.f32 %v848, 0.0
    %v977 = vmax.f32 %v849, 0.0
    %v978 = vmax.f32 %v850, 0.0
    %v979 = vmax.f32 %v851, 0.0
    %v980 = vmax.f32 %v852, 0.0
    %v981 = vmax.f32 %v853, 0.0
    %v982 = vmax.f32 %v854, 0.0
    %v983 = vmax.f32 %v855, 0.0
    %v984 = vmax.f32 %v856, 0.0
    %v985 = vmax.f32 %v857, 0.0
    %v986 = vmax.f32 %v858, 0.0
    %v987 = vmax.f32 %v859, 0.0
    %v988 = vmax.f32 %v860, 0.0
    %v989 = vmax.f32 %v861, 0.0
    %v990 = vmax.f32 %v862, 0.0
    %v991 = vmax.f32 %v863, 0.0
    %v992 = vmax.f32 %v864, 0.0
    %v993 = vmax.f32 %v865, 0.0
    %v994 = vmax.f32 %v866, 0.0
    %v995 = vmax.f32 %v867, 0.0
    %v996 = vmax.f32 %v868, 0.0
    %v997 = vmax.f32 %v869, 0.0
    %v998 = vmax.f32 %v870, 0.0
    %v999 = vmax.f32 %v871, 0.0
    %v1000 = vmax.f32 %v872, 0.0
    %v1001 = vmax.f32 %v873, 0.0
    %v1002 = vmax.f32 %v874, 0.0
    %v1003 = vmax.f32 %v875, 0.0
    %v1004 = vmax.f32 %v876, 0.0
    %v1005 = vmax.f32 %v877, 0.0
    %v1006 = vmax.f32 %v878, 0.0
    %v1007 = vmax.f32 %v879, 0.0
    %v1008 = vmax.f32 %v880, 0.0
    %v1009 = vmax.f32 %v881, 0.0
    %v1010 = vmax.f32 %v882, 0.0
    %v1011 = vmax.f32 %v883, 0.0
    %v1012 = vmax.f32 %v884, 0.0
    %v1013 = vmax.f32 %v885, 0.0
    %v1014 = vmax.f32 %v886, 0.0
    %v1015 = vmax.f32 %v887, 0.0
    %v1016 = vmax.f32 %v888, 0.0
    %v1017 = vmax.f32 %v889, 0.0
    %v1018 = vmax.f32 %v890, 0.0
    %v1019 = vmax.f32 %v891, 0.0
    %v1020 = vmax.f32 %v892, 0.0
    %v1021 = vmax.f32 %v893, 0.0
    %v1022 = vmax.f32 %v894, 0.0
    %v1023 = vmax.f32 %v895, 0.0
    %v1024 = vmax.f32 %v896, 0.0
    %v1025 = vmax.f32 %v897, 0.0
    %v1026 = vmax.f32 %v898, 0.0
    %v1027 = vmax.f32 %v899, 0.0
    %v1028 = vmax.f32 %v900, 0.0
    %v1029 = vmax.f32 %v901, 0.0
    %v1030 = vmax.f32 %v902, 0.0
    %v1031 = vmax.f32 %v903, 0.0
    %v1032 = vmax.f32 %v904, 0.0
    %v1033 = vmax.f32 %v905, 0.0
    %v1034 = vmax.f32 %v906, 0.0
    %v1035 = vmax.f32 %v907, 0.0
    %v1036 = vmax.f32 %v908, 0.0
    %v1037 = vmax.f32 %v909, 0.0
    %v1038 = vmax.f32 %v910, 0.0
    %v1039 = vmax.f32 %v911, 0.0
    %v1040 = vmax.f32 %v912, 0.0
    %v1041 = vmax.f32 %v913, 0.0
    %v1042 = vmax.f32 %v914, 0.0
    %v1043 = vmax.f32 %v915, 0.0
    %v1044 = vmax.f32 %v916, 0.0
    %v1045 = vmax.f32 %v917, 0.0
    %v1046 = vmax.f32 %v918, 0.0
    %v1047 = vmax.f32 %v919, 0.0
    %v1048 = vmax.f32 %v920, 0.0
    %v1049 = vmax.f32 %v921, 0.0
    %v1050 = vmax.f32 %v922, 0.0
    %v1051 = vmax.f32 %v923, 0.0
    %v1052 = vmax.f32 %v924, 0.0
    %v1053 = vmax.f32 %v925, 0.0
    %v1054 = vmax.f32 %v926, 0.0
    %v1055 = vmax.f32 %v927, 0.0
    %v1056 = vmax.f32 %v928, 0.0
    %v1057 = vmax.f32 %v929, 0.0
    %v1058 = vmax.f32 %v930, 0.0
    %v1059 = vmax.f32 %v931, 0.0
    %v1060 = vmax.f32 %v932, 0.0
    %v1061 = vmax.f32 %v933, 0.0
    %v1062 = vmax.f32 %v934, 0.0
    %v1063 = vmax.f32 %v935, 0.0
    %v1064 = vmax.f32 %v936, 0.0
    %v1065 = vmax.f32 %v937, 0.0
    %v1066 = vmax.f32 %v938, 0.0
    %v1067 = vmax.f32 %v939, 0.0
    %v1068 = vmax.f32 %v940, 0.0
    %v1069 = vmax.f32 %v941, 0.0
    %v1070 = vmax.f32 %v942, 0.0
    %v1071 = vmax.f32 %v943, 0.0
    %v1072 = vmax.f32 %v944, 0.0
    %v1073 = vmax.f32 %v945, 0.0
    %v1074 = vmax.f32 %v946, 0.0
    %v1075 = vmax.f32 %v947, 0.0
    %v1076 = vmax.f32 %v948, 0.0
    %v1077 = vmax.f32 %v949, 0.0
    %v1078 = vmax.f32 %v950, 0.0
    %v1079 = vmax.f32 %v951, 0.0
    %v1080 = vmax.f32 %v952, 0.0
    %v1081 = vmax.f32 %v953, 0.0
    %v1082 = vmax.f32 %v954, 0.0
    %v1083 = vmax.f32 %v955, 0.0
    %v1084 = vpack.c.bf16 %v957, %v956
    %v1085 = vpack.c.bf16 %v959, %v958
    %v1086 = vpack.c.bf16 %v961, %v960
    %v1087 = vpack.c.bf16 %v963, %v962
    %v1088 = vpack.c.bf16 %v965, %v964
    %v1089 = vpack.c.bf16 %v967, %v966
    %v1090 = vpack.c.bf16 %v969, %v968
    %v1091 = vpack.c.bf16 %v971, %v970
    %v1092 = vpack.c.bf16 %v973, %v972
    %v1093 = vpack.c.bf16 %v975, %v974
    %v1094 = vpack.c.bf16 %v977, %v976
    %v1095 = vpack.c.bf16 %v979, %v978
    %v1096 = vpack.c.bf16 %v981, %v980
    %v1097 = vpack.c.bf16 %v983, %v982
    %v1098 = vpack.c.bf16 %v985, %v984
    %v1099 = vpack.c.bf16 %v987, %v986
    %v1100 = vpack.c.bf16 %v989, %v988
    %v1101 = vpack.c.bf16 %v991, %v990
    %v1102 = vpack.c.bf16 %v993, %v992
    %v1103 = vpack.c.bf16 %v995, %v994
    %v1104 = vpack.c.bf16 %v997, %v996
    %v1105 = vpack.c.bf16 %v999, %v998
    %v1106 = vpack.c.bf16 %v1001, %v1000
    %v1107 = vpack.c.bf16 %v1003, %v1002
    %v1108 = vpack.c.bf16 %v1005, %v1004
    %v1109 = vpack.c.bf16 %v1007, %v1006
    %v1110 = vpack.c.bf16 %v1009, %v1008
    %v1111 = vpack.c.bf16 %v1011, %v1010
    %v1112 = vpack.c.bf16 %v1013, %v1012
    %v1113 = vpack.c.bf16 %v1015, %v1014
    %v1114 = vpack.c.bf16 %v1017, %v1016
    %v1115 = vpack.c.bf16 %v1019, %v1018
    %v1116 = vpack.c.bf16 %v1021, %v1020
    %v1117 = vpack.c.bf16 %v1023, %v1022
    %v1118 = vpack.c.bf16 %v1025, %v1024
    %v1119 = vpack.c.bf16 %v1027, %v1026
    %v1120 = vpack.c.bf16 %v1029, %v1028
    %v1121 = vpack.c.bf16 %v1031, %v1030
    %v1122 = vpack.c.bf16 %v1033, %v1032
    %v1123 = vpack.c.bf16 %v1035, %v1034
    %v1124 = vpack.c.bf16 %v1037, %v1036
    %v1125 = vpack.c.bf16 %v1039, %v1038
    %v1126 = vpack.c.bf16 %v1041, %v1040
    %v1127 = vpack.c.bf16 %v1043, %v1042
    %v1128 = vpack.c.bf16 %v1045, %v1044
    %v1129 = vpack.c.bf16 %v1047, %v1046
    %v1130 = vpack.c.bf16 %v1049, %v1048
    %v1131 = vpack.c.bf16 %v1051, %v1050
    %v1132 = vpack.c.bf16 %v1053, %v1052
    %v1133 = vpack.c.bf16 %v1055, %v1054
    %v1134 = vpack.c.bf16 %v1057, %v1056
    %v1135 = vpack.c.bf16 %v1059, %v1058
    %v1136 = vpack.c.bf16 %v1061, %v1060
    %v1137 = vpack.c.bf16 %v1063, %v1062
    %v1138 = vpack.c.bf16 %v1065, %v1064
    %v1139 = vpack.c.bf16 %v1067, %v1066
    %v1140 = vpack.c.bf16 %v1069, %v1068
    %v1141 = vpack.c.bf16 %v1071, %v1070
    %v1142 = vpack.c.bf16 %v1073, %v1072
    %v1143 = vpack.c.bf16 %v1075, %v1074
    %v1144 = vpack.c.bf16 %v1077, %v1076
    %v1145 = vpack.c.bf16 %v1079, %v1078
    %v1146 = vpack.c.bf16 %v1081, %v1080
    %v1147 = vpack.c.bf16 %v1083, %v1082
    %1148 = vst [vmem:[#allocation2] sm:$0xff] %v1084
    %1149 = vst [vmem:[#allocation2 + $0x8] sm:$0xff] %v1085
    %1150 = vst [vmem:[#allocation2 + $0x10] sm:$0xff] %v1086
    %1151 = vst [vmem:[#allocation2 + $0x18] sm:$0xff] %v1087
    %1152 = vst [vmem:[#allocation2 + $0x20] sm:$0xff] %v1088
    %1153 = vst [vmem:[#allocation2 + $0x28] sm:$0xff] %v1089
    %1154 = vst [vmem:[#allocation2 + $0x30] sm:$0xff] %v1090
    %1155 = vst [vmem:[#allocation2 + $0x38] sm:$0xff] %v1091
    %1156 = vst [vmem:[#allocation2 + $0x40] sm:$0xff] %v1092
    %1157 = vst [vmem:[#allocation2 + $0x48] sm:$0xff] %v1093
    %1158 = vst [vmem:[#allocation2 + $0x50] sm:$0xff] %v1094
    %1159 = vst [vmem:[#allocation2 + $0x58] sm:$0xff] %v1095
    %1160 = vst [vmem:[#allocation2 + $0x60] sm:$0xff] %v1096
    %1161 = vst [vmem:[#allocation2 + $0x68] sm:$0xff] %v1097
    %1162 = vst [vmem:[#allocation2 + $0x70] sm:$0xff] %v1098
    %1163 = vst [vmem:[#allocation2 + $0x78] sm:$0xff] %v1099
    %1164 = vst [vmem:[#allocation2 + $0x80] sm:$0xff] %v1100
    %1165 = vst [vmem:[#allocation2 + $0x88] sm:$0xff] %v1101
    %1166 = vst [vmem:[#allocation2 + $0x90] sm:$0xff] %v1102
    %1167 = vst [vmem:[#allocation2 + $0x98] sm:$0xff] %v1103
    %1168 = vst [vmem:[#allocation2 + $0xa0] sm:$0xff] %v1104
    %1169 = vst [vmem:[#allocation2 + $0xa8] sm:$0xff] %v1105
    %1170 = vst [vmem:[#allocation2 + $0xb0] sm:$0xff] %v1106
    %1171 = vst [vmem:[#allocation2 + $0xb8] sm:$0xff] %v1107
    %1172 = vst [vmem:[#allocation2 + $0xc0] sm:$0xff] %v1108
    %1173 = vst [vmem:[#allocation2 + $0xc8] sm:$0xff] %v1109
    %1174 = vst [vmem:[#allocation2 + $0xd0] sm:$0xff] %v1110
    %1175 = vst [vmem:[#allocation2 + $0xd8] sm:$0xff] %v1111
    %1176 = vst [vmem:[#allocation2 + $0xe0] sm:$0xff] %v1112
    %1177 = vst [vmem:[#allocation2 + $0xe8] sm:$0xff] %v1113
    %1178 = vst [vmem:[#allocation2 + $0xf0] sm:$0xff] %v1114
    %1179 = vst [vmem:[#allocation2 + $0xf8] sm:$0xff] %v1115
    %1180 = vst [vmem:[#allocation2 + $0x100] sm:$0xff] %v1116
    %1181 = vst [vmem:[#allocation2 + $0x108] sm:$0xff] %v1117
    %1182 = vst [vmem:[#allocation2 + $0x110] sm:$0xff] %v1118
    %1183 = vst [vmem:[#allocation2 + $0x118] sm:$0xff] %v1119
    %1184 = vst [vmem:[#allocation2 + $0x120] sm:$0xff] %v1120
    %1185 = vst [vmem:[#allocation2 + $0x128] sm:$0xff] %v1121
    %1186 = vst [vmem:[#allocation2 + $0x130] sm:$0xff] %v1122
    %1187 = vst [vmem:[#allocation2 + $0x138] sm:$0xff] %v1123
    %1188 = vst [vmem:[#allocation2 + $0x140] sm:$0xff] %v1124
    %1189 = vst [vmem:[#allocation2 + $0x148] sm:$0xff] %v1125
    %1190 = vst [vmem:[#allocation2 + $0x150] sm:$0xff] %v1126
    %1191 = vst [vmem:[#allocation2 + $0x158] sm:$0xff] %v1127
    %1192 = vst [vmem:[#allocation2 + $0x160] sm:$0xff] %v1128
    %1193 = vst [vmem:[#allocation2 + $0x168] sm:$0xff] %v1129
    %1194 = vst [vmem:[#allocation2 + $0x170] sm:$0xff] %v1130
    %1195 = vst [vmem:[#allocation2 + $0x178] sm:$0xff] %v1131
    %1196 = vst [vmem:[#allocation2 + $0x180] sm:$0xff] %v1132
    %1197 = vst [vmem:[#allocation2 + $0x188] sm:$0xff] %v1133
    %1198 = vst [vmem:[#allocation2 + $0x190] sm:$0xff] %v1134
    %1199 = vst [vmem:[#allocation2 + $0x198] sm:$0xff] %v1135
    %1200 = vst [vmem:[#allocation2 + $0x1a0] sm:$0xff] %v1136
    %1201 = vst [vmem:[#allocation2 + $0x1a8] sm:$0xff] %v1137
    %1202 = vst [vmem:[#allocation2 + $0x1b0] sm:$0xff] %v1138
    %1203 = vst [vmem:[#allocation2 + $0x1b8] sm:$0xff] %v1139
    %1204 = vst [vmem:[#allocation2 + $0x1c0] sm:$0xff] %v1140
    %1205 = vst [vmem:[#allocation2 + $0x1c8] sm:$0xff] %v1141
    %1206 = vst [vmem:[#allocation2 + $0x1d0] sm:$0xff] %v1142
    %1207 = vst [vmem:[#allocation2 + $0x1d8] sm:$0xff] %v1143
    %1208 = vst [vmem:[#allocation2 + $0x1e0] sm:$0xff] %v1144
    %1209 = vst [vmem:[#allocation2 + $0x1e8] sm:$0xff] %v1145
    %1210 = vst [vmem:[#allocation2 + $0x1f0] sm:$0xff] %v1146
    %1211 = vst [vmem:[#allocation2 + $0x1f8] sm:$0xff] %v1147
    // Predicated region
    $region18: #{tpu_custom_call.1} parent=1 // pred_check
      _
    $region19: #{tpu_custom_call.1} parent=1 // pred_check_branch
      %1213 = sbr.rel (0) target = $region21
    $region20: #{tpu_custom_call.1} parent=1 // pred_region
      %1215 = vsyncadd [#allocation3], 0
      %s1216 = sshll.u32 [#allocation2], 4
      %s1217 = int_to_ptr.vmem [resolvable:$true] %s1216
      %s1218 = sshll.u32 %s4, 4
      %s1219 = int_to_ptr.hbm [resolvable:$true] %s1218
      %1224 = dma.vmem_to_hbm [thread:$0]  %s1217, 8192, %s1219, [#allocation3], 128, 128, 8
    $region21: #{tpu_custom_call.1} parent=1 // pred_fallthru
      _
    // Predicated region
    $region22: #{tpu_custom_call.1} parent=1 // pred_check
      _
    $region23: #{tpu_custom_call.1} parent=1 // pred_check_branch
      %1226 = sbr.rel (0) target = $region25
    $region24: #{tpu_custom_call.1} parent=1 // pred_region
      %1228 = dma.done [#allocation3], 8192
    $region25: #{tpu_custom_call.1} parent=1 // pred_fallthru
      _
    %1229 = vsyncpa [#allocation3], 1

</llo_original>
